<compile_context>
chip_gen: v7x
topology: tpu7x:2x2x1
jax: 0.10.0
libtpu: 0.0.40
codegen_flags: <defaults>
</compile_context>

<pallas_src>
import functools

import jax
import jax.numpy as jnp
from jax.experimental import pallas as pl
from jax.experimental.pallas import tpu as pltpu


def _features_gap_kernel(patches_ref, w_ref, b_ref, out_ref, acc_ref, *, inv_hw):
    """One (batch b, row-tile m) grid step.

    patches_ref : (tm, K_pad)    bf16 im2col tile for batch b, rows [m*tm, (m+1)*tm)
    w_ref       : (K_pad, N_pad) bf16 flattened conv weight (resident)
    b_ref       : (1, N_pad)     f32 conv bias (resident)
    out_ref     : (1, 1, N_pad)  f32 pooled features for batch b (resident across m)
    acc_ref     : (1, N_pad)     f32 running spatial sum (VMEM scratch)
    """
    m = pl.program_id(1)

    @pl.when(m == 0)
    def _init():
        acc_ref[...] = jnp.zeros_like(acc_ref)

    # conv as matmul on the MXU (bf16 operands, f32 accumulation)
    feat = jnp.dot(patches_ref[...], w_ref[...],
                   preferred_element_type=jnp.float32)          # (tm, N_pad)
    # bias + ReLU on the VPU
    feat = jnp.maximum(feat + b_ref[...], 0.0)
    # partial global-average-pool: accumulate the spatial row-sum
    acc_ref[...] += jnp.sum(feat, axis=0, keepdims=True)

    @pl.when(m == pl.num_programs(1) - 1)
    def _finalize():
        out_ref[0] = acc_ref[...] * inv_hw


def feature_extractor_forward(x_nchw, conv_w, conv_b):
    """Equivalent of FeatureExtractor.forward for model_type='mimic_densenet'.

    x_nchw : (B, C_in, H, W)  float32  (PyTorch NCHW convention)
    conv_w : (C_feat, C_in, 3, 3)      (PyTorch Conv2d weight layout)
    conv_b : (C_feat,)
    returns: (B, C_feat) float32
    """
    B, C_in, H, W = x_nchw.shape
    C_feat = conv_w.shape[0]
    HW = H * W
    K = 9 * C_in

    # lane-dense padding targets
    K_pad = ((K + 127) // 128) * 128
    N_pad = ((C_feat + 127) // 128) * 128

    # tile of the per-batch spatial axis: multiple of 8 that divides H*W
    tm = 128
    if HW % tm != 0:
        tm = HW
    assert tm % 8 == 0 and HW % tm == 0, "H*W must be a multiple of 8"
    n_m = HW // tm

    # --- glue: NCHW -> NHWC, im2col for a 3x3 / stride 1 / pad 1 conv ------
    x = jnp.transpose(x_nchw, (0, 2, 3, 1)).astype(jnp.float32)   # (B, H, W, C)
    xp = jnp.pad(x, ((0, 0), (1, 1), (1, 1), (0, 0)))
    patch_list = [xp[:, dy:dy + H, dx:dx + W, :]
                  for dy in range(3) for dx in range(3)]
    patches = jnp.concatenate(patch_list, axis=-1)                 # (B, H, W, 9*C)
    patches = patches.reshape(B * HW, K)
    patches = jnp.pad(patches, ((0, 0), (0, K_pad - K)))           # lane-dense K
    patches = patches.astype(jnp.bfloat16)                         # halve HBM traffic

    # flatten conv weight to match (dy, dx, c_in) patch ordering, pad, bf16
    w_flat = jnp.transpose(conv_w, (2, 3, 1, 0)).reshape(K, C_feat).astype(jnp.float32)
    w_flat = jnp.pad(w_flat, ((0, K_pad - K), (0, N_pad - C_feat))).astype(jnp.bfloat16)
    b_flat = jnp.pad(conv_b.astype(jnp.float32), (0, N_pad - C_feat)).reshape(1, N_pad)

    kernel = functools.partial(_features_gap_kernel, inv_hw=1.0 / float(HW))

    out_padded = pl.pallas_call(
        kernel,
        out_shape=jax.ShapeDtypeStruct((B, 1, N_pad), jnp.float32),
        grid_spec=pltpu.PrefetchScalarGridSpec(
            num_scalar_prefetch=0,
            grid=(B, n_m),
            in_specs=[
                # patches tile for (batch b, row-tile m): rows b*HW + m*tm ...
                pl.BlockSpec((tm, K_pad), lambda b, m: (b * n_m + m, 0)),
                # weights / bias stay resident in VMEM across the whole grid
                pl.BlockSpec((K_pad, N_pad), lambda b, m: (0, 0)),
                pl.BlockSpec((1, N_pad), lambda b, m: (0, 0)),
            ],
            out_specs=pl.BlockSpec((1, 1, N_pad), lambda b, m: (b, 0, 0)),
            scratch_shapes=[pltpu.VMEM((1, N_pad), jnp.float32)],
        ),
        compiler_params=pltpu.CompilerParams(
            dimension_semantics=("parallel", "arbitrary"),
            vmem_limit_bytes=32 * 1024 * 1024,
        ),
    )(patches, w_flat, b_flat)

    return out_padded[:, 0, :C_feat]                               # drop lane padding


def _reference_forward(x_nchw, conv_w, conv_b):
    """Plain-JAX f32 reference (same synthetic backbone) for a sanity check."""
    y = jax.lax.conv_general_dilated(
        x_nchw.astype(jnp.float32), conv_w.astype(jnp.float32),
        window_strides=(1, 1), padding=((1, 1), (1, 1)),
        dimension_numbers=("NCHW", "OIHW", "NCHW"))
    y = jnp.maximum(y + conv_b[None, :, None, None], 0.0)
    return y.mean(axis=(-1, -2))                                   # (B, C_feat)


if __name__ == "__main__":
    key = jax.random.PRNGKey(0)
    k_x, k_w, k_b = jax.random.split(key, 3)

    B, C_in, H, W = 2, 4, 16, 16
    C_feat = 32

    x = jax.random.normal(k_x, (B, C_in, H, W), dtype=jnp.float32)
    conv_w = 0.1 * jax.random.normal(k_w, (C_feat, C_in, 3, 3), dtype=jnp.float32)
    conv_b = 0.05 * jax.random.normal(k_b, (C_feat,), dtype=jnp.float32)

    out = feature_extractor_forward(x, conv_w, conv_b)
    out = jax.block_until_ready(out)

    ref = _reference_forward(x, conv_w, conv_b)
    assert out.shape == (B, C_feat)
    # bf16 MXU operands (f32 accumulation) vs pure-f32 reference -> loose tol.
    assert jnp.allclose(out, ref, atol=1e-2, rtol=1e-2)

    print("KERNEL_OK")
</pallas_src>

<mosaic_0001>
module attributes {stable_mosaic.version = 11 : i64} {
  func.func @_features_gap_kernel(%arg0: i32, %arg1: i32, %arg2: memref<128x128xbf16, #tpu.memory_space<vmem>>, %arg3: memref<128x128xbf16, #tpu.memory_space<vmem>>, %arg4: memref<1x128xf32, #tpu.memory_space<vmem>>, %arg5: memref<1x1x128xf32, #tpu.memory_space<vmem>>, %arg6: memref<1x128xf32, #tpu.memory_space<vmem>>) attributes {dimension_semantics = [#tpu.dimension_semantics<parallel>, #tpu.dimension_semantics<arbitrary>], iteration_bounds = array<i64: 2, 2>, scalar_prefetch = 0 : i64, scratch_operands = 1 : i64, tpu.core_type = #tpu.core_type<tc>, window_params = [{transform_indices = @transform_0, window_bounds = array<i64: 128, 128>}, {pipeline_mode = #tpu.pipeline_mode<synchronous>, transform_indices = @transform_1, window_bounds = array<i64: 128, 128>}, {pipeline_mode = #tpu.pipeline_mode<synchronous>, transform_indices = @transform_2, window_bounds = array<i64: 1, 128>}, {transform_indices = @transform_3, window_bounds = array<i64: 1, 1, 128>}]} {
    %c0_i32 = arith.constant 0 : i32
    %0 = arith.cmpi eq, %arg1, %c0_i32 : i32
    %1 = arith.extui %0 : i1 to i32
    %c0_i32_0 = arith.constant 0 : i32
    %2 = arith.cmpi ne, %1, %c0_i32_0 : i32
    scf.if %2 {
      %cst_13 = arith.constant 0.000000e+00 : f32
      %19 = vector.broadcast %cst_13 : f32 to vector<1x128xf32>
      %c0_14 = arith.constant 0 : index
      %c0_15 = arith.constant 0 : index
      %20 = vector.load %arg6[%c0_14, %c0_15] : memref<1x128xf32, #tpu.memory_space<vmem>>, vector<1x128xf32>
      tpu.vector_store %arg6[%c0_14, %c0_15], %19 {strides = array<i32>} : memref<1x128xf32, #tpu.memory_space<vmem>>, vector<1x128xf32>,
    } else {
    }
    %c0 = arith.constant 0 : index
    %c0_1 = arith.constant 0 : index
    %3 = vector.load %arg2[%c0, %c0_1] : memref<128x128xbf16, #tpu.memory_space<vmem>>, vector<128x128xbf16>
    %c0_2 = arith.constant 0 : index
    %c0_3 = arith.constant 0 : index
    %4 = vector.load %arg3[%c0_2, %c0_3] : memref<128x128xbf16, #tpu.memory_space<vmem>>, vector<128x128xbf16>
    %cst = arith.constant dense<0.000000e+00> : vector<128x128xf32>
    %5 = tpu.matmul %3, %4, %cst {dimension_numbers = #tpu.dot_dimension_numbers<[1], [0], [0], [1], [0, 0, 1, 1], [], []>} : vector<128x128xbf16>, vector<128x128xbf16>, vector<128x128xf32> -> vector<128x128xf32>
    %c0_4 = arith.constant 0 : index
    %c0_5 = arith.constant 0 : index
    %6 = vector.load %arg4[%c0_4, %c0_5] : memref<1x128xf32, #tpu.memory_space<vmem>>, vector<1x128xf32>
    %7 = vector.broadcast %6 : vector<1x128xf32> to vector<128x128xf32>
    %8 = arith.addf %5, %7 : vector<128x128xf32>
    %cst_6 = arith.constant 0.000000e+00 : f32
    %9 = vector.broadcast %cst_6 : f32 to vector<128x128xf32>
    %10 = arith.maximumf %8, %9 : vector<128x128xf32>
    %c0_7 = arith.constant 0 : index
    %c0_8 = arith.constant 0 : index
    %11 = vector.load %arg6[%c0_7, %c0_8] : memref<1x128xf32, #tpu.memory_space<vmem>>, vector<1x128xf32>
    %cst_9 = arith.constant dense<0.000000e+00> : vector<128xf32>
    %12 = vector.multi_reduction <add>, %10, %cst_9 [0] : vector<128x128xf32> to vector<128xf32>
    %13 = vector.shape_cast %12 : vector<128xf32> to vector<1x128xf32>
    %14 = arith.addf %11, %13 : vector<1x128xf32>
    %c0_10 = arith.constant 0 : index
    %c0_11 = arith.constant 0 : index
    %15 = vector.load %arg6[%c0_10, %c0_11] : memref<1x128xf32, #tpu.memory_space<vmem>>, vector<1x128xf32>
    tpu.vector_store %arg6[%c0_10, %c0_11], %14 {strides = array<i32>} : memref<1x128xf32, #tpu.memory_space<vmem>>, vector<1x128xf32>,
    %c1_i32 = arith.constant 1 : i32
    %16 = arith.cmpi eq, %arg1, %c1_i32 : i32
    %17 = arith.extui %16 : i1 to i32
    %c0_i32_12 = arith.constant 0 : i32
    %18 = arith.cmpi ne, %17, %c0_i32_12 : i32
    scf.if %18 {
      %c0_13 = arith.constant 0 : index
      %c0_14 = arith.constant 0 : index
      %19 = vector.load %arg6[%c0_13, %c0_14] : memref<1x128xf32, #tpu.memory_space<vmem>>, vector<1x128xf32>
      %cst_15 = arith.constant 3.906250e-03 : f32
      %20 = vector.broadcast %cst_15 : f32 to vector<1x128xf32>
      %21 = arith.mulf %19, %20 : vector<1x128xf32>
      %c0_16 = arith.constant 0 : index
      %c0_17 = arith.constant 0 : index
      %c0_18 = arith.constant 0 : index
      %22 = vector.load %arg5[%c0_16, %c0_17, %c0_18] : memref<1x1x128xf32, #tpu.memory_space<vmem>>, vector<1x1x128xf32>
      %23 = vector.shape_cast %22 : vector<1x1x128xf32> to vector<1x128xf32>
      %24 = vector.shape_cast %21 : vector<1x128xf32> to vector<1x1x128xf32>
      tpu.vector_store %arg5[%c0_16, %c0_17, %c0_18], %24 {strides = array<i32>} : memref<1x1x128xf32, #tpu.memory_space<vmem>>, vector<1x1x128xf32>,
    } else {
    }
    return
  }
  func.func @transform_0(%arg0: i32, %arg1: i32) -> (i32, i32) {
    %c2_i32 = arith.constant 2 : i32
    %0 = arith.muli %arg0, %c2_i32 : i32
    %1 = arith.addi %0, %arg1 : i32
    %c0_i32 = arith.constant 0 : i32
    %c0_i32_0 = arith.constant 0 : i32
    return %1, %c0_i32 : i32, i32
  }
  func.func @transform_1(%arg0: i32, %arg1: i32) -> (i32, i32) {
    %c0_i32 = arith.constant 0 : i32
    %c0_i32_0 = arith.constant 0 : i32
    %c0_i32_1 = arith.constant 0 : i32
    return %c0_i32, %c0_i32_0 : i32, i32
  }
  func.func @transform_2(%arg0: i32, %arg1: i32) -> (i32, i32) {
    %c0_i32 = arith.constant 0 : i32
    %c0_i32_0 = arith.constant 0 : i32
    %c0_i32_1 = arith.constant 0 : i32
    return %c0_i32, %c0_i32_0 : i32, i32
  }
  func.func @transform_3(%arg0: i32, %arg1: i32) -> (i32, i32, i32) {
    %c0_i32 = arith.constant 0 : i32
    %c0_i32_0 = arith.constant 0 : i32
    %c0_i32_1 = arith.constant 0 : i32
    return %arg0, %c0_i32, %c0_i32_0 : i32, i32, i32
  }
}

</mosaic_0001>

<llo_original>
// kernel: tpu_custom_call.1
$region0: #{tpu_custom_call.1}
  #allocation0 [shape = 'u32[]', space=smem, size = 0x4, offset = 0x4, fixed_abs, tag = 'smem constant byte address 0x4 - core index']
  #allocation1 [shape = 'u32[144,128]{1,0:T(1,128)}', space=vmem, size = 0x12000, scoped, tag = 'internal scratch']
  #allocation2 [shape = 'f32[1,128]{1,0:T(1,128)}', space=vmem, size = 0x200, scoped, tag = 'scratch operand']
  %s0 = inlined_call_operand.hbm [shape: bf16[512,128], index: 0, kind: input, shape index: {}]
  %s1 = inlined_call_operand.hbm [shape: bf16[128,128], index: 1, kind: input, shape index: {}]
  %s2 = inlined_call_operand.vmem [shape: f32[1,128], index: 2, kind: input, shape index: {}]
  %s3 = inlined_call_operand.hbm [shape: f32[2,1,128], index: 3, kind: output, shape index: {}]
  %s4 = sld [smem:[#allocation0]]
  $region61: #{tpu_custom_call.1} parent=0
    _
  %s6 = ssub.s32 1, %s4
  %s7 = scalar_select 0, %s6, %s4
  $region1: #{tpu_custom_call.1} parent=0
    #allocation3 [shape = 'u8[65536]{0}', space=vmem, size = 0x10000, scoped, tag = 'input window, operand 0']
    #allocation4 [shape = 's32[2]{0}', space=sflag, size = 0x8, scoped, tag = 'scoped memory for tpu_custom_call.1']
    #allocation5 [shape = 's32[2]{0}', space=sflag, size = 0x8, scoped, tag = 'scoped memory for tpu_custom_call.1']
    #allocation6 [shape = 'u8[32768]{0}', space=vmem, size = 0x8000, scoped, tag = 'input window, operand 1, single buffered']
    #allocation7 [shape = 's32[1]{0}', space=sflag, size = 0x4, scoped, tag = 'scoped memory for tpu_custom_call.1']
    #allocation8 [shape = 'u8[1024]{0}', space=vmem, size = 0x400, scoped, tag = 'output window, operand 0']
    %8 = vsyncpa [#allocation4], 0
    %s9 = scalar_lea.sflag [#allocation4], 1
    %10 = vsyncpa %s9, 0
    %11 = vsyncpa [#allocation7], 0
    %12 = vsyncpa [#allocation5], 0
    %s13 = scalar_lea.sflag [#allocation5], 1
    %14 = vsyncpa %s13, 0
    loop: start=0, step=1, limit=6
    $region2: #{tpu_custom_call.1} parent=1 // loop_pre_header
      _
    $region3: #{tpu_custom_call.1} parent=1 // loop_header
      %s16 = sphi 0, %s20
      %p17 = scmp.ge.s32.totalorder %s16, 6
      %s23 = sphi 0, %s35
      %s24 = sphi 0, %s31
      %s25 = sphi 0, %s23
      %s26 = sphi 0, %s24
      %s27 = sphi 0, %s25
      %s28 = sphi 0, %s26
      %s42 = sphi 0, %s44
      %s45 = sphi 0, %s42
      %s46 = sphi 0, %s45
      %s62 = sphi 0, %s46
      %s66 = sphi 0, %s66
      %s68 = sphi 0, %s66
      %s69 = sphi 0, %s68
      %s83 = sphi 0, %s69
      %s87 = sphi 0, %s87
      %s89 = sphi 0, %s87
      %s90 = sphi 0, %s89
      %s104 = sphi 0, %s90
      %s110 = sphi 0, %s112
      %s113 = sphi 0, %s110
      %s114 = sphi 0, %s113
      %s130 = sphi 0, %s114
    $region4: #{tpu_custom_call.1} parent=1 // loop_header_branch
      %19 = sbr.rel (%p17) target = $region8
    $region5: #{tpu_custom_call.1} parent=1 // loop_body
      %s21 = ssub.s32 %s16, 1
      %s22 = ssub.s32 %s16, 2
      %s29 = sadd.s32 1, %s24
      %p30 = scmp.ge.s32.totalorder %s29, 2
      %s31 = scalar_select %p30, 0, %s29
      %s32 = sadd.s32 1, %s23
      %s33 = scalar_select %p30, %s32, %s23
      %p34 = scmp.ge.s32.totalorder %s33, 2
      %s35 = scalar_select %p34, 0, %s33
      %s36 = smul.u32 %s23, 2
      %s37 = sadd.s32 %s36, %s24
      %s38 = smul.u32 %s35, 2
      %s39 = sadd.s32 %s38, %s31
      %s40 = ssub.s32 %s37, %s39
      %p41 = scmp.eq.s32.totalorder %s40, 0
      %s43 = sadd.s32 %s42, 1
      %s44 = scalar_select %p41, %s42, %s43
      %p47 = pneg %p41
      %p48 = scmp.eq.s32.totalorder %s16, 3
      %p49 = por %p47, %p48
      %p50 = scmp.ne.s32.totalorder %s42, %s45
      %p51 = scmp.eq.s32.totalorder %s16, 0
      %p52 = por %p50, %p51
      %p53 = scmp.ne.s32.totalorder %s42, %s45
      %p54 = scmp.eq.s32.totalorder %s21, 3
      %p55 = por %p53, %p54
      %p56 = scmp.ne.s32.totalorder %s45, %s46
      %p57 = scmp.eq.s32.totalorder %s21, 0
      %p58 = por %p56, %p57
      %p59 = scmp.ne.s32.totalorder %s45, %s46
      %p60 = scmp.eq.s32.totalorder %s22, 3
      %p61 = por %p59, %p60
      %p63 = scmp.ne.s32.totalorder %s46, %s62
      %p64 = scmp.eq.s32.totalorder %s22, 0
      %p65 = por %p63, %p64
      %s67 = sadd.s32 %s66, 1
      %p70 = scmp.eq.s32.totalorder %s16, 3
      %p71 = scmp.ne.s32.totalorder %s66, %s68
      %p72 = scmp.eq.s32.totalorder %s16, 0
      %p73 = por %p71, %p72
      %p74 = scmp.ne.s32.totalorder %s66, %s68
      %p75 = scmp.eq.s32.totalorder %s21, 3
      %p76 = por %p74, %p75
      %p77 = scmp.ne.s32.totalorder %s68, %s69
      %p78 = scmp.eq.s32.totalorder %s21, 0
      %p79 = por %p77, %p78
      %p80 = scmp.ne.s32.totalorder %s68, %s69
      %p81 = scmp.eq.s32.totalorder %s22, 3
      %p82 = por %p80, %p81
      %p84 = scmp.ne.s32.totalorder %s69, %s83
      %p85 = scmp.eq.s32.totalorder %s22, 0
      %p86 = por %p84, %p85
      %s88 = sadd.s32 %s87, 1
      %p91 = scmp.eq.s32.totalorder %s16, 3
      %p92 = scmp.ne.s32.totalorder %s87, %s89
      %p93 = scmp.eq.s32.totalorder %s16, 0
      %p94 = por %p92, %p93
      %p95 = scmp.ne.s32.totalorder %s87, %s89
      %p96 = scmp.eq.s32.totalorder %s21, 3
      %p97 = por %p95, %p96
      %p98 = scmp.ne.s32.totalorder %s89, %s90
      %p99 = scmp.eq.s32.totalorder %s21, 0
      %p100 = por %p98, %p99
      %p101 = scmp.ne.s32.totalorder %s89, %s90
      %p102 = scmp.eq.s32.totalorder %s22, 3
      %p103 = por %p101, %p102
      %p105 = scmp.ne.s32.totalorder %s90, %s104
      %p106 = scmp.eq.s32.totalorder %s22, 0
      %p107 = por %p105, %p106
      %s108 = ssub.s32 %s23, %s35
      %p109 = scmp.eq.s32.totalorder %s108, 0
      %s111 = sadd.s32 %s110, 1
      %s112 = scalar_select %p109, %s110, %s111
      %p115 = pneg %p109
      %p116 = scmp.eq.s32.totalorder %s16, 3
      %p117 = por %p115, %p116
      %p118 = scmp.ne.s32.totalorder %s110, %s113
      %p119 = scmp.eq.s32.totalorder %s16, 0
      %p120 = por %p118, %p119
      %p121 = scmp.ne.s32.totalorder %s110, %s113
      %p122 = scmp.eq.s32.totalorder %s21, 3
      %p123 = por %p121, %p122
      %p124 = scmp.ne.s32.totalorder %s113, %s114
      %p125 = scmp.eq.s32.totalorder %s21, 0
      %p126 = por %p124, %p125
      %p127 = scmp.ne.s32.totalorder %s113, %s114
      %p128 = scmp.eq.s32.totalorder %s22, 3
      %p129 = por %p127, %p128
      %p131 = scmp.ne.s32.totalorder %s114, %s130
      %p132 = scmp.eq.s32.totalorder %s22, 0
      %p133 = por %p131, %p132
      %p134 = scmp.le.s32.totalorder 1, %s16
      %p135 = scmp.lt.s32.totalorder %s16, 5
      %p136 = pnand %p134, %p135
      %p137 = pneg %p136
      // Predicated region
      $region9: #{tpu_custom_call.1} parent=5 // pred_check
        _
      $region10: #{tpu_custom_call.1} parent=5 // pred_check_branch
        %139 = sbr.rel (%p136) target = $region12
      $region11: #{tpu_custom_call.1} parent=5 // pred_region
        %s140 = ssub.s32 %s16, 1
        // Predicated region
        $region13: #{tpu_custom_call.1} parent=11 // pred_check
          %p141 = pneg %p79
        $region14: #{tpu_custom_call.1} parent=11 // pred_check_branch
          %143 = sbr.rel (%p141) target = $region16
        $region15: #{tpu_custom_call.1} parent=11 // pred_region
          %s145 = ssub.s32 1024, 1024
          %146 = vsyncadd [#allocation7], %s145
          %s147 = sshll.u32 [#allocation6], 4
          %s148 = int_to_ptr.vmem [resolvable:$true] %s147
          %153 = dma.hbm_to_vmem [thread:$0]  %s1, 1024, %s148, [#allocation7], 64, 64, 4
        $region16: #{tpu_custom_call.1} parent=11 // pred_fallthru
          _
        // Predicated region
        $region17: #{tpu_custom_call.1} parent=11 // pred_check
          %p154 = pneg %p100
        $region18: #{tpu_custom_call.1} parent=11 // pred_check_branch
          %156 = sbr.rel (%p154) target = $region20
        $region19: #{tpu_custom_call.1} parent=11 // pred_region
          _
        $region20: #{tpu_custom_call.1} parent=11 // pred_fallthru
          _
      $region12: #{tpu_custom_call.1} parent=5 // pred_fallthru
        _
      %p157 = scmp.lt.s32.totalorder %s16, 4
      // Predicated region
      $region21: #{tpu_custom_call.1} parent=5 // pred_check
        %p158 = pneg %p157
      $region22: #{tpu_custom_call.1} parent=5 // pred_check_branch
        %160 = sbr.rel (%p158) target = $region24
      $region23: #{tpu_custom_call.1} parent=5 // pred_region
        // Predicated region
        $region25: #{tpu_custom_call.1} parent=23 // pred_check
          %p161 = pneg %p52
        $region26: #{tpu_custom_call.1} parent=23 // pred_check_branch
          %163 = sbr.rel (%p161) target = $region28
        $region27: #{tpu_custom_call.1} parent=23 // pred_region
          %s164 = sand.u32 %s42, 1
          %s165 = scalar_lea.sflag [#allocation4], %s164
          %s166 = sand.u32 %s42, 1
          %s167 = smul.addr %s166, 64
          %s168 = scalar_lea.vmem [#allocation3], %s167
          %s169 = smul.u32 %s23, 2
          %s170 = sadd.s32 %s169, %s24
          %s171 = smul.u32 16, %s170
          %s173 = ssub.s32 1024, 1024
          %174 = vsyncadd %s165, %s173
          %s175 = smul.addr %s171, 64
          %s176 = scalar_lea.hbm %s0, %s175
          %s177 = sshll.u32 %s168, 4
          %s178 = int_to_ptr.vmem [resolvable:$true] %s177
          %183 = dma.hbm_to_vmem [thread:$0]  %s176, 1024, %s178, %s165, 64, 64, 4
        $region28: #{tpu_custom_call.1} parent=23 // pred_fallthru
          _
      $region24: #{tpu_custom_call.1} parent=5 // pred_fallthru
        _
      %p184 = scmp.le.s32.totalorder 1, %s16
      %p185 = scmp.lt.s32.totalorder %s16, 5
      %p186 = pnand %p184, %p185
      %p187 = pneg %p186
      // Predicated region
      $region29: #{tpu_custom_call.1} parent=5 // pred_check
        _
      $region30: #{tpu_custom_call.1} parent=5 // pred_check_branch
        %189 = sbr.rel (%p186) target = $region32
      $region31: #{tpu_custom_call.1} parent=5 // pred_region
        %s190 = ssub.s32 %s16, 1
        %s191 = sand.u32 %s45, 1
        %s192 = scalar_lea.sflag [#allocation4], %s191
        %s193 = sand.u32 %s45, 1
        %s194 = smul.addr %s193, 64
        %s195 = scalar_lea.vmem [#allocation3], %s194
        // Predicated region
        $region33: #{tpu_custom_call.1} parent=31 // pred_check
          %p196 = pneg %p58
        $region34: #{tpu_custom_call.1} parent=31 // pred_check_branch
          %198 = sbr.rel (%p196) target = $region36
        $region35: #{tpu_custom_call.1} parent=31 // pred_region
          %199 = dma.done %s192, 1024
        $region36: #{tpu_custom_call.1} parent=31 // pred_fallthru
          _
        // Predicated region
        $region37: #{tpu_custom_call.1} parent=31 // pred_check
          %p200 = pneg %p79
        $region38: #{tpu_custom_call.1} parent=31 // pred_check_branch
          %202 = sbr.rel (%p200) target = $region40
        $region39: #{tpu_custom_call.1} parent=31 // pred_region
          %203 = dma.done [#allocation7], 1024
        $region40: #{tpu_custom_call.1} parent=31 // pred_fallthru
          _
        %s204 = sand.u32 %s45, 1
        %s205 = scalar_lea.sflag [#allocation4], %s204
        %s206 = sand.u32 %s45, 1
        %s207 = smul.addr %s206, 64
        %s208 = scalar_lea.vmem [#allocation3], %s207
        %p209 = pneg %p58
        %p210 = pneg %p55
        %p211 = pneg %p79
        %p212 = pneg %p76
        %p213 = pneg %p100
        %p214 = pneg %p97
        %p215 = pneg %p126
        %p216 = pneg %p123
        %s217 = sand.u32 %s113, 1
        %s218 = scalar_lea.sflag [#allocation5], %s217
        %s219 = sand.u32 %s113, 1
        %s220 = scalar_lea.vmem [#allocation8], %s219
        %s221 = smul.u32 %s25, 2
        %s222 = sadd.s32 %s221, %s26
        %s223 = smul.u32 16, %s222
        %p225 = scmp.eq.s32.totalorder %s26, 0
        // Predicated region
        $region41: #{tpu_custom_call.1} parent=31 // pred_check
          %p226 = pneg %p225
        $region42: #{tpu_custom_call.1} parent=31 // pred_check_branch
          %228 = sbr.rel (%p226) target = $region44
        $region43: #{tpu_custom_call.1} parent=31 // pred_region
          %229 = vst [vmem:[#allocation2] sm:$0x1] 0.0
        $region44: #{tpu_custom_call.1} parent=31 // pred_fallthru
          _
        %v230 = vld [vmem:[%s195] sm:$0xf]
        %v231 = vld [vmem:[%s195 + $0x4] sm:$0xf]
        %v232 = vld [vmem:[%s195 + $0x8] sm:$0xf]
        %v233 = vld [vmem:[%s195 + $0xc] sm:$0xf]
        %v234 = vld [vmem:[%s195 + $0x10] sm:$0xf]
        %v235 = vld [vmem:[%s195 + $0x14] sm:$0xf]
        %v236 = vld [vmem:[%s195 + $0x18] sm:$0xf]
        %v237 = vld [vmem:[%s195 + $0x1c] sm:$0xf]
        %v238 = vld [vmem:[%s195 + $0x20] sm:$0xf]
        %v239 = vld [vmem:[%s195 + $0x24] sm:$0xf]
        %v240 = vld [vmem:[%s195 + $0x28] sm:$0xf]
        %v241 = vld [vmem:[%s195 + $0x2c] sm:$0xf]
        %v242 = vld [vmem:[%s195 + $0x30] sm:$0xf]
        %v243 = vld [vmem:[%s195 + $0x34] sm:$0xf]
        %v244 = vld [vmem:[%s195 + $0x38] sm:$0xf]
        %v245 = vld [vmem:[%s195 + $0x3c] sm:$0xf]
        %v246 = vld [vmem:[#allocation6] sm:$0xf]
        %v247 = vld [vmem:[#allocation6 + $0x4] sm:$0xf]
        %v248 = vld [vmem:[#allocation6 + $0x8] sm:$0xf]
        %v249 = vld [vmem:[#allocation6 + $0xc] sm:$0xf]
        %v250 = vld [vmem:[#allocation6 + $0x10] sm:$0xf]
        %v251 = vld [vmem:[#allocation6 + $0x14] sm:$0xf]
        %v252 = vld [vmem:[#allocation6 + $0x18] sm:$0xf]
        %v253 = vld [vmem:[#allocation6 + $0x1c] sm:$0xf]
        %v254 = vld [vmem:[#allocation6 + $0x20] sm:$0xf]
        %v255 = vld [vmem:[#allocation6 + $0x24] sm:$0xf]
        %v256 = vld [vmem:[#allocation6 + $0x28] sm:$0xf]
        %v257 = vld [vmem:[#allocation6 + $0x2c] sm:$0xf]
        %v258 = vld [vmem:[#allocation6 + $0x30] sm:$0xf]
        %v259 = vld [vmem:[#allocation6 + $0x34] sm:$0xf]
        %v260 = vld [vmem:[#allocation6 + $0x38] sm:$0xf]
        %v261 = vld [vmem:[#allocation6 + $0x3c] sm:$0xf]
        %v262 = vld [vmem:[%s2] sm:$0x1]
        %v264 = vlaneseq
        %v265 = vshrl.u32 %v264, 7
        %v266 = vsub.s32 0, %v265
        %v267 = vrot.slane %v262, %v266
        %v285 = vunpack.c.l.b16 %v230
        %v286 = vunpack.c.l.b16 %v231
        %v287 = vunpack.c.l.b16 %v232
        %v288 = vunpack.c.l.b16 %v233
        %v289 = vunpack.c.l.b16 %v234
        %v290 = vunpack.c.l.b16 %v235
        %v291 = vunpack.c.l.b16 %v236
        %v292 = vunpack.c.l.b16 %v237
        %v293 = vunpack.c.l.b16 %v238
        %v294 = vunpack.c.l.b16 %v239
        %v295 = vunpack.c.l.b16 %v240
        %v296 = vunpack.c.l.b16 %v241
        %v297 = vunpack.c.l.b16 %v242
        %v298 = vunpack.c.l.b16 %v243
        %v299 = vunpack.c.l.b16 %v244
        %v300 = vunpack.c.l.b16 %v245
        %v301 = vpack.c.b16 %v286, %v285
        %v302 = vpack.c.b16 %v288, %v287
        %v303 = vpack.c.b16 %v290, %v289
        %v304 = vpack.c.b16 %v292, %v291
        %v305 = vpack.c.b16 %v294, %v293
        %v306 = vpack.c.b16 %v296, %v295
        %v307 = vpack.c.b16 %v298, %v297
        %v308 = vpack.c.b16 %v300, %v299
        %v333 = vunpack.c.l.b16 %v246
        %v334 = vunpack.c.l.b16 %v247
        %v335 = vunpack.c.l.b16 %v248
        %v336 = vunpack.c.l.b16 %v249
        %v337 = vunpack.c.l.b16 %v250
        %v338 = vunpack.c.l.b16 %v251
        %v339 = vunpack.c.l.b16 %v252
        %v340 = vunpack.c.l.b16 %v253
        %v341 = vunpack.c.l.b16 %v254
        %v342 = vunpack.c.l.b16 %v255
        %v343 = vunpack.c.l.b16 %v256
        %v344 = vunpack.c.l.b16 %v257
        %v345 = vunpack.c.l.b16 %v258
        %v346 = vunpack.c.l.b16 %v259
        %v347 = vunpack.c.l.b16 %v260
        %v348 = vunpack.c.l.b16 %v261
        %v349 = vpack.c.b16 %v334, %v333
        %v350 = vpack.c.b16 %v336, %v335
        %v351 = vpack.c.b16 %v338, %v337
        %v352 = vpack.c.b16 %v340, %v339
        %v353 = vpack.c.b16 %v342, %v341
        %v354 = vpack.c.b16 %v344, %v343
        %v355 = vpack.c.b16 %v346, %v345
        %v356 = vpack.c.b16 %v348, %v347
        %365 = vmatprep.subr.bf16.mxu0 0
        %366 = vmatpush1.bf16.msra.mxu0 %v349
        %367 = vmatprep.subr.bf16.mxu0 0
        %368 = vmatpush1.bf16.msra.mxu0 %v350
        %369 = vmatprep.subr.bf16.mxu0 0
        %370 = vmatpush1.bf16.msra.mxu0 %v351
        %371 = vmatprep.subr.bf16.mxu0 0
        %372 = vmatpush1.bf16.msra.mxu0 %v352
        %373 = vmatprep.subr.bf16.mxu0 0
        %374 = vmatpush1.bf16.msra.mxu0 %v353
        %375 = vmatprep.subr.bf16.mxu0 0
        %376 = vmatpush1.bf16.msra.mxu0 %v354
        %377 = vmatprep.subr.bf16.mxu0 0
        %378 = vmatpush1.bf16.msra.mxu0 %v355
        %379 = vmatprep.subr.bf16.mxu0 0
        %380 = vmatpush1.bf16.msra.mxu0 %v356
        %381 = vmatprep.subr.bf16.mxu0 0
        %382 = vmatpush1.bf16.msra.mxu0 0
        %383 = vmatprep.subr.bf16.mxu0 0
        %384 = vmatpush1.bf16.msra.mxu0 0
        %385 = vmatprep.subr.bf16.mxu0 0
        %386 = vmatpush1.bf16.msra.mxu0 0
        %387 = vmatprep.subr.bf16.mxu0 0
        %388 = vmatpush1.bf16.msra.mxu0 0
        %389 = vmatprep.subr.bf16.mxu0 0
        %390 = vmatpush1.bf16.msra.mxu0 0
        %391 = vmatprep.subr.bf16.mxu0 0
        %392 = vmatpush1.bf16.msra.mxu0 0
        %393 = vmatprep.subr.bf16.mxu0 0
        %394 = vmatpush1.bf16.msra.mxu0 0
        %395 = vmatprep.subr.bf16.mxu0 0
        %396 = vmatpush1.bf16.msra.mxu0 0
        %397 = vmatprep.mubr.bf16.mxu0 0
        %398 = vmatmul.mubr.bf16.gmra.mrb[0].mxu0 %v301
        %v399 = vpop.f32.mrb[0].mxu0
        %v400 = vadd.f32 %v267, %v399
        %v401 = vpop.f32.mrb[0].mxu0
        %v402 = vpop.f32.mrb[0].mxu0
        %v403 = vadd.f32 %v267, %v402
        %v404 = vpop.f32.mrb[0].mxu0
        %405 = vmatprep.mubr.bf16.mxu0 0
        %406 = vmatmul.mubr.bf16.gmra.mrb[0].mxu0 %v302
        %v407 = vpop.f32.mrb[0].mxu0
        %v408 = vadd.f32 %v267, %v407
        %v409 = vpop.f32.mrb[0].mxu0
        %v410 = vpop.f32.mrb[0].mxu0
        %v411 = vadd.f32 %v267, %v410
        %v412 = vpop.f32.mrb[0].mxu0
        %413 = vmatprep.mubr.bf16.mxu0 0
        %414 = vmatmul.mubr.bf16.gmra.mrb[0].mxu0 %v303
        %v415 = vpop.f32.mrb[0].mxu0
        %v416 = vadd.f32 %v267, %v415
        %v417 = vpop.f32.mrb[0].mxu0
        %v418 = vpop.f32.mrb[0].mxu0
        %v419 = vadd.f32 %v267, %v418
        %v420 = vpop.f32.mrb[0].mxu0
        %421 = vmatprep.mubr.bf16.mxu0 0
        %422 = vmatmul.mubr.bf16.gmra.mrb[0].mxu0 %v304
        %v423 = vpop.f32.mrb[0].mxu0
        %v424 = vadd.f32 %v267, %v423
        %v425 = vpop.f32.mrb[0].mxu0
        %v426 = vpop.f32.mrb[0].mxu0
        %v427 = vadd.f32 %v267, %v426
        %v428 = vpop.f32.mrb[0].mxu0
        %429 = vmatprep.mubr.bf16.mxu0 0
        %430 = vmatmul.mubr.bf16.gmra.mrb[0].mxu0 %v305
        %v431 = vpop.f32.mrb[0].mxu0
        %v432 = vadd.f32 %v267, %v431
        %v433 = vpop.f32.mrb[0].mxu0
        %v434 = vpop.f32.mrb[0].mxu0
        %v435 = vadd.f32 %v267, %v434
        %v436 = vpop.f32.mrb[0].mxu0
        %437 = vmatprep.mubr.bf16.mxu0 0
        %438 = vmatmul.mubr.bf16.gmra.mrb[0].mxu0 %v306
        %v439 = vpop.f32.mrb[0].mxu0
        %v440 = vadd.f32 %v267, %v439
        %v441 = vpop.f32.mrb[0].mxu0
        %v442 = vpop.f32.mrb[0].mxu0
        %v443 = vadd.f32 %v267, %v442
        %v444 = vpop.f32.mrb[0].mxu0
        %445 = vmatprep.mubr.bf16.mxu0 0
        %446 = vmatmul.mubr.bf16.gmra.mrb[0].mxu0 %v307
        %v447 = vpop.f32.mrb[0].mxu0
        %v448 = vadd.f32 %v267, %v447
        %v449 = vpop.f32.mrb[0].mxu0
        %v450 = vpop.f32.mrb[0].mxu0
        %v451 = vadd.f32 %v267, %v450
        %v452 = vpop.f32.mrb[0].mxu0
        %453 = vmatprep.mubr.bf16.mxu0 0
        %454 = vmatmul.mubr.bf16.gmra.mrb[0].mxu0 %v308
        %v455 = vpop.f32.mrb[0].mxu0
        %v456 = vadd.f32 %v267, %v455
        %v457 = vpop.f32.mrb[0].mxu0
        %v458 = vpop.f32.mrb[0].mxu0
        %v459 = vadd.f32 %v267, %v458
        %v460 = vpop.f32.mrb[0].mxu0
        %461 = vdwg.mxu0
        %v462 = vmax.f32 %v400, 0.0
        %v463 = vmax.f32 %v403, 0.0
        %v464 = vmax.f32 %v408, 0.0
        %v465 = vmax.f32 %v411, 0.0
        %v466 = vmax.f32 %v416, 0.0
        %v467 = vmax.f32 %v419, 0.0
        %v468 = vmax.f32 %v424, 0.0
        %v469 = vmax.f32 %v427, 0.0
        %v470 = vmax.f32 %v432, 0.0
        %v471 = vmax.f32 %v435, 0.0
        %v472 = vmax.f32 %v440, 0.0
        %v473 = vmax.f32 %v443, 0.0
        %v474 = vmax.f32 %v448, 0.0
        %v475 = vmax.f32 %v451, 0.0
        %v476 = vmax.f32 %v456, 0.0
        %v477 = vmax.f32 %v459, 0.0
        %v478 = vld [vmem:[#allocation2] sm:$0x1]
        %v479 = vadd.f32 %v462, %v463
        %v480 = vadd.f32 %v479, %v464
        %v481 = vadd.f32 %v480, %v465
        %v482 = vadd.f32 %v481, %v466
        %v483 = vadd.f32 %v482, %v467
        %v484 = vadd.f32 %v483, %v468
        %v485 = vadd.f32 %v484, %v469
        %v486 = vadd.f32 %v485, %v470
        %v487 = vadd.f32 %v486, %v471
        %v488 = vadd.f32 %v487, %v472
        %v489 = vadd.f32 %v488, %v473
        %v490 = vadd.f32 %v489, %v474
        %v491 = vadd.f32 %v490, %v475
        %v492 = vadd.f32 %v491, %v476
        %v493 = vadd.f32 %v492, %v477
        %v494 = vrot.slane %v493, 4
        %v495 = vadd.f32 %v493, %v494
        %v496 = vrot.slane %v495, 2
        %v497 = vadd.f32 %v495, %v496
        %v498 = vrot.slane %v497, 1
        %v499 = vadd.f32 %v497, %v498
        %v500 = vadd.f32 %v478, %v499
        %501 = vst [vmem:[#allocation2] sm:$0x1] %v500
        %p502 = scmp.eq.s32.totalorder %s26, 1
        // Predicated region
        $region45: #{tpu_custom_call.1} parent=31 // pred_check
          %p503 = pneg %p502
        $region46: #{tpu_custom_call.1} parent=31 // pred_check_branch
          %505 = sbr.rel (%p503) target = $region48
        $region47: #{tpu_custom_call.1} parent=31 // pred_region
          %v506 = vld [vmem:[#allocation2] sm:$0x1]
          %v507 = vmul.f32 %v506, 0.00390625
          %508 = vst [vmem:[%s220] sm:$0x1] %v507
        $region48: #{tpu_custom_call.1} parent=31 // pred_fallthru
          _
        %s509 = sand.u32 %s113, 1
        %s510 = scalar_lea.sflag [#allocation5], %s509
        %s511 = sand.u32 %s113, 1
        %s512 = scalar_lea.vmem [#allocation8], %s511
        // Predicated region
        $region49: #{tpu_custom_call.1} parent=31 // pred_check
          %p513 = pneg %p123
        $region50: #{tpu_custom_call.1} parent=31 // pred_check_branch
          %515 = sbr.rel (%p513) target = $region52
        $region51: #{tpu_custom_call.1} parent=31 // pred_region
          %s517 = ssub.s32 16, 16
          %518 = vsyncadd %s510, %s517
          %s519 = smul.addr %s25, 16
          %s520 = scalar_lea.hbm %s3, %s519
          %s522 = sshll.u32 %s512, 4
          %s523 = int_to_ptr.vmem [resolvable:$true] %s522
          %525 = dma.vmem_to_hbm [thread:$0]  %s523, 16, %s520, %s510
        $region52: #{tpu_custom_call.1} parent=31 // pred_fallthru
          _
      $region32: #{tpu_custom_call.1} parent=5 // pred_fallthru
        _
      %p526 = scmp.le.s32.totalorder 2, %s16
      // Predicated region
      $region53: #{tpu_custom_call.1} parent=5 // pred_check
        %p527 = pneg %p526
      $region54: #{tpu_custom_call.1} parent=5 // pred_check_branch
        %529 = sbr.rel (%p527) target = $region56
      $region55: #{tpu_custom_call.1} parent=5 // pred_region
        %s530 = ssub.s32 %s16, 2
        // Predicated region
        $region57: #{tpu_custom_call.1} parent=55 // pred_check
          %p531 = pneg %p129
        $region58: #{tpu_custom_call.1} parent=55 // pred_check_branch
          %533 = sbr.rel (%p531) target = $region60
        $region59: #{tpu_custom_call.1} parent=55 // pred_region
          %s534 = sand.u32 %s114, 1
          %s535 = scalar_lea.sflag [#allocation5], %s534
          %s536 = sand.u32 %s114, 1
          %s537 = scalar_lea.vmem [#allocation8], %s536
          %538 = dma.done %s535, 16
        $region60: #{tpu_custom_call.1} parent=55 // pred_fallthru
          _
      $region56: #{tpu_custom_call.1} parent=5 // pred_fallthru
        _
    $region6: #{tpu_custom_call.1} parent=1 // loop_footer
      %s20 = sadd.s32 1, %s16
    $region7: #{tpu_custom_call.1} parent=1 // loop_footer_branch
      %15 = sbr.rel target = $region3
    $region8: #{tpu_custom_call.1} parent=1 // loop_exit
      _
    %539 = vsyncpa [#allocation4], 1
    %s540 = scalar_lea.sflag [#allocation4], 1
    %541 = vsyncpa %s540, 1
    %542 = vsyncpa [#allocation7], 1
    %543 = vsyncpa [#allocation5], 1
    %s544 = scalar_lea.sflag [#allocation5], 1
    %545 = vsyncpa %s544, 1

</llo_original>
